<compile_context>
chip_gen: v7x
topology: tpu7x:2x2x1
jax: 0.10.0
libtpu: 0.0.40
codegen_flags: <defaults>
</compile_context>

<pallas_src>
import jax
import jax.numpy as jnp
import numpy as np
from jax import lax
from jax.experimental import pallas as pl
from jax.experimental.pallas import tpu as pltpu

EMB_DIM = 1
POSE_DIM = 9
IN_DIM = EMB_DIM + POSE_DIM   # 10
HIDDEN = 32
FACTOR = 0.01
BM_MAX = 2048                 # batch rows per grid step for large B (multiple of 8 and 128)


def _round_up(x, m):
    return (x + m - 1) // m * m


# -----------------------------------------------------------------------------------------
# Kernel 1: per-camera precompute (runs once over all padded cameras).
#   cam_table[c] = init_pose[c] + FACTOR * MLP(x[c]),  x[c] = [init_pose[c] (9), emb[c] (1)]
# -----------------------------------------------------------------------------------------
def cam_table_kernel(tbl_ref, w1_ref, b1_ref, w2_ref, b2_ref, out_ref):
    x = tbl_ref[...]                                                     # (Cp, 10)
    h = jnp.dot(x, w1_ref[...], preferred_element_type=jnp.float32) + b1_ref[...]
    h = jnp.maximum(h, 0.0)                                              # ReLU
    r = jnp.dot(h, w2_ref[...], preferred_element_type=jnp.float32) + b2_ref[...]
    out_ref[...] = x[:, :POSE_DIM] + FACTOR * r                          # init + factor*res


# -----------------------------------------------------------------------------------------
# Kernel 2: per-ray gather.  out[i] = cam_table[cam_id[i]] via a one-hot MXU matmul.
# -----------------------------------------------------------------------------------------
def gather_kernel(ids_ref, table_ref, out_ref):
    bm = out_ref.shape[0]
    cp = table_ref.shape[0]
    ids = ids_ref[...]                                                   # (bm, 1) int32
    onehot = (ids == lax.broadcasted_iota(jnp.int32, (bm, cp), 1)).astype(jnp.float32)
    out_ref[...] = jnp.dot(onehot, table_ref[...], preferred_element_type=jnp.float32)


def camera_model_forward(cam_id, emb_table, init_pose, w1, b1, w2, b2):
    """Pallas-backed CameraModel.forward.

    cam_id:    (B,) integer camera ids.
    emb_table: (num_cams, 1) nn.Embedding weight.
    init_pose: (num_cams, 9) registered init_pose buffer.
    w1:        (10, 32) Linear(10,32) weight, PRE-TRANSPOSED to [in, out]
               (row 0 = img_emb input, rows 1..9 = init_pose inputs).
    b1:        (32,) or (1, 32).
    w2:        (32, 9) Linear(32,9) weight, pre-transposed to [in, out].
    b2:        (9,) or (1, 9).
    Returns the (B, 9) refined pose vectors.
    """
    cam_id = jnp.asarray(cam_id).astype(jnp.int32)   # torch.int(cam_id)
    B = cam_id.shape[0]
    num_cams = emb_table.shape[0]

    emb_table = jnp.asarray(emb_table, jnp.float32)
    init_pose = jnp.asarray(init_pose, jnp.float32)
    w1 = jnp.asarray(w1, jnp.float32)
    w2 = jnp.asarray(w2, jnp.float32)
    assert w1.shape == (IN_DIM, HIDDEN) and w2.shape == (HIDDEN, POSE_DIM)
    b1 = jnp.asarray(b1, jnp.float32).reshape(1, HIDDEN)
    b2 = jnp.asarray(b2, jnp.float32).reshape(1, POSE_DIM)

    # Merged lookup table, columns = [init_pose(9), img_emb(1)]; pad cameras to a lane tile.
    # TODO(synk): for very large num_cams (>> a few K) a DMA row-gather would beat the
    # one-hot matmul; camera rigs are small so the MXU gather is the right regime here.
    Cp = _round_up(max(num_cams, 1), 128)
    tbl = jnp.concatenate([init_pose, emb_table], axis=1)                # (C, 10)
    tbl = jnp.pad(tbl, ((0, Cp - num_cams), (0, 0)))                     # (Cp, 10)
    # Reorder W1 rows to match merged-table column order (pose rows first, emb row last).
    w1m = jnp.concatenate([w1[EMB_DIM:, :], w1[:EMB_DIM, :]], axis=0)    # (10, 32)

    # ---- stage 1: one-shot per-camera table ------------------------------------------
    cam_table = pl.pallas_call(
        cam_table_kernel,
        out_shape=jax.ShapeDtypeStruct((Cp, POSE_DIM), jnp.float32),
        grid=(1,),
        in_specs=[
            pl.BlockSpec((Cp, IN_DIM), lambda i: (0, 0)),
            pl.BlockSpec((IN_DIM, HIDDEN), lambda i: (0, 0)),
            pl.BlockSpec((1, HIDDEN), lambda i: (0, 0)),
            pl.BlockSpec((HIDDEN, POSE_DIM), lambda i: (0, 0)),
            pl.BlockSpec((1, POSE_DIM), lambda i: (0, 0)),
        ],
        out_specs=pl.BlockSpec((Cp, POSE_DIM), lambda i: (0, 0)),
        compiler_params=pltpu.CompilerParams(dimension_semantics=("arbitrary",)),
        cost_estimate=pl.CostEstimate(
            flops=2 * Cp * (IN_DIM * HIDDEN + HIDDEN * POSE_DIM),
            transcendentals=0,
            bytes_accessed=4 * (Cp * IN_DIM + IN_DIM * HIDDEN + HIDDEN
                                + HIDDEN * POSE_DIM + POSE_DIM + Cp * POSE_DIM)),
    )(tbl, w1m, b1, w2, b2)

    # ---- stage 2: per-ray one-hot gather (batch-tiled, "parallel" grid) ---------------
    if B <= BM_MAX:
        bm = _round_up(B, 8)
    else:
        bm = BM_MAX
    Bp = _round_up(B, bm)
    ids = cam_id if Bp == B else jnp.pad(cam_id, (0, Bp - B))            # pad with cam 0
    ids = ids.reshape(Bp, 1)                                             # sublane-oriented ids
    grid = (Bp // bm,)

    cam = pl.pallas_call(
        gather_kernel,
        out_shape=jax.ShapeDtypeStruct((Bp, POSE_DIM), jnp.float32),
        grid=grid,
        in_specs=[
            pl.BlockSpec((bm, 1), lambda i: (i, 0)),
            pl.BlockSpec((Cp, POSE_DIM), lambda i: (0, 0)),   # table resident across steps
        ],
        out_specs=pl.BlockSpec((bm, POSE_DIM), lambda i: (i, 0)),
        compiler_params=pltpu.CompilerParams(dimension_semantics=("parallel",)),
        cost_estimate=pl.CostEstimate(
            flops=2 * Bp * Cp * POSE_DIM,
            transcendentals=0,
            bytes_accessed=4 * (Bp + Cp * POSE_DIM + Bp * POSE_DIM)),
    )(ids, cam_table)

    if Bp != B:
        cam = cam[:B]
    # TODO(synk): SE3(cam) lie-group construction is an external class not defined in the
    # reference module; the 9-dim refined pose vector is returned as-is.
    return cam


def _reference_forward(cam_id, emb_table, init_pose, w1, b1, w2, b2):
    cam_id = cam_id.astype(jnp.int32)
    img_emb = emb_table[cam_id]
    init_cam = init_pose[cam_id]
    x = jnp.concatenate([img_emb, init_cam], axis=1)
    h = jnp.maximum(x @ w1 + b1, 0.0)
    r = h @ w2 + b2
    return init_cam + FACTOR * r


if __name__ == "__main__":
    key = jax.random.PRNGKey(0)
    num_cams = 16
    batch = 8

    k_emb, k_pose, k_w1, k_b1, k_w2, k_b2, k_id = jax.random.split(key, 7)

    # nn.Embedding default init: N(0, 1)
    emb_table = jax.random.normal(k_emb, (num_cams, EMB_DIM), jnp.float32)
    # init_pose buffer: (num_cams, 9)
    init_pose = jax.random.normal(k_pose, (num_cams, POSE_DIM), jnp.float32)

    # nn.Linear default init: U(-1/sqrt(fan_in), 1/sqrt(fan_in)); stored [in, out]
    fan1 = float(IN_DIM)
    w1 = jax.random.uniform(k_w1, (IN_DIM, HIDDEN), jnp.float32,
                            -fan1 ** -0.5, fan1 ** -0.5)
    b1 = jax.random.uniform(k_b1, (HIDDEN,), jnp.float32,
                            -fan1 ** -0.5, fan1 ** -0.5)
    fan2 = float(HIDDEN)
    w2 = jax.random.uniform(k_w2, (HIDDEN, POSE_DIM), jnp.float32,
                            -fan2 ** -0.5, fan2 ** -0.5)
    b2 = jax.random.uniform(k_b2, (POSE_DIM,), jnp.float32,
                            -fan2 ** -0.5, fan2 ** -0.5)

    cam_id = jax.random.randint(k_id, (batch,), 0, num_cams, dtype=jnp.int32)

    out = jax.jit(camera_model_forward)(cam_id, emb_table, init_pose, w1, b1, w2, b2)
    out = jax.block_until_ready(out)

    ref = _reference_forward(cam_id, emb_table, init_pose, w1, b1, w2, b2)
    np.testing.assert_allclose(np.asarray(out), np.asarray(ref), rtol=1e-5, atol=1e-5)

    print("KERNEL_OK")
</pallas_src>

<mosaic_0001>
module attributes {stable_mosaic.version = 11 : i64} {
  func.func @gather_kernel(%arg0: i32, %arg1: memref<8x1xi32, #tpu.memory_space<vmem>>, %arg2: memref<128x9xf32, #tpu.memory_space<vmem>>, %arg3: memref<8x9xf32, #tpu.memory_space<vmem>>) attributes {dimension_semantics = [#tpu.dimension_semantics<parallel>], iteration_bounds = array<i64: 1>, scalar_prefetch = 0 : i64, scratch_operands = 0 : i64, tpu.core_type = #tpu.core_type<tc>, window_params = [{transform_indices = @transform_0, window_bounds = array<i64: 8, 1>}, {pipeline_mode = #tpu.pipeline_mode<synchronous>, transform_indices = @transform_1, window_bounds = array<i64: 128, 9>}, {transform_indices = @transform_2, window_bounds = array<i64: 8, 9>}]} {
    %c0 = arith.constant 0 : index
    %c0_0 = arith.constant 0 : index
    %0 = vector.load %arg1[%c0, %c0_0] : memref<8x1xi32, #tpu.memory_space<vmem>>, vector<8x1xi32>
    %1 = tpu.iota {dimensions = array<i32: 1>} : vector<8x128xi32>
    %2 = vector.broadcast %0 : vector<8x1xi32> to vector<8x128xi32>
    %3 = arith.cmpi eq, %2, %1 : vector<8x128xi32>
    %4 = arith.extui %3 : vector<8x128xi1> to vector<8x128xi32>
    %5 = arith.sitofp %4 : vector<8x128xi32> to vector<8x128xf32>
    %c0_1 = arith.constant 0 : index
    %c0_2 = arith.constant 0 : index
    %6 = vector.load %arg2[%c0_1, %c0_2] : memref<128x9xf32, #tpu.memory_space<vmem>>, vector<128x9xf32>
    %cst = arith.constant dense<0.000000e+00> : vector<8x9xf32>
    %7 = tpu.matmul %5, %6, %cst {dimension_numbers = #tpu.dot_dimension_numbers<[1], [0], [0], [1], [0, 0, 1, 1], [], []>} : vector<8x128xf32>, vector<128x9xf32>, vector<8x9xf32> -> vector<8x9xf32>
    %c0_3 = arith.constant 0 : index
    %c0_4 = arith.constant 0 : index
    %8 = vector.load %arg3[%c0_3, %c0_4] : memref<8x9xf32, #tpu.memory_space<vmem>>, vector<8x9xf32>
    tpu.vector_store %arg3[%c0_3, %c0_4], %7 {strides = array<i32>} : memref<8x9xf32, #tpu.memory_space<vmem>>, vector<8x9xf32>,
    return
  }
  func.func @transform_0(%arg0: i32) -> (i32, i32) {
    %c0_i32 = arith.constant 0 : i32
    %c0_i32_0 = arith.constant 0 : i32
    return %arg0, %c0_i32 : i32, i32
  }
  func.func @transform_1(%arg0: i32) -> (i32, i32) {
    %c0_i32 = arith.constant 0 : i32
    %c0_i32_0 = arith.constant 0 : i32
    %c0_i32_1 = arith.constant 0 : i32
    return %c0_i32, %c0_i32_0 : i32, i32
  }
  func.func @transform_2(%arg0: i32) -> (i32, i32) {
    %c0_i32 = arith.constant 0 : i32
    %c0_i32_0 = arith.constant 0 : i32
    return %arg0, %c0_i32 : i32, i32
  }
}

module attributes {stable_mosaic.version = 11 : i64} {
  func.func @cam_table_kernel(%arg0: i32, %arg1: memref<128x10xf32, #tpu.memory_space<vmem>>, %arg2: memref<10x32xf32, #tpu.memory_space<vmem>>, %arg3: memref<1x32xf32, #tpu.memory_space<vmem>>, %arg4: memref<32x9xf32, #tpu.memory_space<vmem>>, %arg5: memref<1x9xf32, #tpu.memory_space<vmem>>, %arg6: memref<128x9xf32, #tpu.memory_space<vmem>>) attributes {dimension_semantics = [#tpu.dimension_semantics<arbitrary>], iteration_bounds = array<i64: 1>, scalar_prefetch = 0 : i64, scratch_operands = 0 : i64, tpu.core_type = #tpu.core_type<tc>, window_params = [{pipeline_mode = #tpu.pipeline_mode<synchronous>, transform_indices = @transform_0, window_bounds = array<i64: 128, 10>}, {pipeline_mode = #tpu.pipeline_mode<synchronous>, transform_indices = @transform_1, window_bounds = array<i64: 10, 32>}, {pipeline_mode = #tpu.pipeline_mode<synchronous>, transform_indices = @transform_2, window_bounds = array<i64: 1, 32>}, {pipeline_mode = #tpu.pipeline_mode<synchronous>, transform_indices = @transform_3, window_bounds = array<i64: 32, 9>}, {pipeline_mode = #tpu.pipeline_mode<synchronous>, transform_indices = @transform_4, window_bounds = array<i64: 1, 9>}, {pipeline_mode = #tpu.pipeline_mode<synchronous>, transform_indices = @transform_5, window_bounds = array<i64: 128, 9>}]} {
    %c0 = arith.constant 0 : index
    %c0_0 = arith.constant 0 : index
    %0 = vector.load %arg1[%c0, %c0_0] : memref<128x10xf32, #tpu.memory_space<vmem>>, vector<128x10xf32>
    %c0_1 = arith.constant 0 : index
    %c0_2 = arith.constant 0 : index
    %1 = vector.load %arg2[%c0_1, %c0_2] : memref<10x32xf32, #tpu.memory_space<vmem>>, vector<10x32xf32>
    %cst = arith.constant dense<0.000000e+00> : vector<128x32xf32>
    %2 = tpu.matmul %0, %1, %cst {dimension_numbers = #tpu.dot_dimension_numbers<[1], [0], [0], [1], [0, 0, 1, 1], [], []>} : vector<128x10xf32>, vector<10x32xf32>, vector<128x32xf32> -> vector<128x32xf32>
    %c0_3 = arith.constant 0 : index
    %c0_4 = arith.constant 0 : index
    %3 = vector.load %arg3[%c0_3, %c0_4] : memref<1x32xf32, #tpu.memory_space<vmem>>, vector<1x32xf32>
    %4 = vector.broadcast %3 : vector<1x32xf32> to vector<128x32xf32>
    %5 = arith.addf %2, %4 : vector<128x32xf32>
    %cst_5 = arith.constant 0.000000e+00 : f32
    %6 = vector.broadcast %cst_5 : f32 to vector<128x32xf32>
    %7 = arith.maximumf %5, %6 : vector<128x32xf32>
    %c0_6 = arith.constant 0 : index
    %c0_7 = arith.constant 0 : index
    %8 = vector.load %arg4[%c0_6, %c0_7] : memref<32x9xf32, #tpu.memory_space<vmem>>, vector<32x9xf32>
    %cst_8 = arith.constant dense<0.000000e+00> : vector<128x9xf32>
    %9 = tpu.matmul %7, %8, %cst_8 {dimension_numbers = #tpu.dot_dimension_numbers<[1], [0], [0], [1], [0, 0, 1, 1], [], []>} : vector<128x32xf32>, vector<32x9xf32>, vector<128x9xf32> -> vector<128x9xf32>
    %c0_9 = arith.constant 0 : index
    %c0_10 = arith.constant 0 : index
    %10 = vector.load %arg5[%c0_9, %c0_10] : memref<1x9xf32, #tpu.memory_space<vmem>>, vector<1x9xf32>
    %11 = vector.broadcast %10 : vector<1x9xf32> to vector<128x9xf32>
    %12 = arith.addf %9, %11 : vector<128x9xf32>
    %13 = vector.extract_strided_slice %0 {offsets = [0, 0], sizes = [128, 9], strides = [1, 1]} : vector<128x10xf32> to vector<128x9xf32>
    %cst_11 = arith.constant 0.00999999977 : f32
    %14 = vector.broadcast %cst_11 : f32 to vector<128x9xf32>
    %15 = arith.mulf %14, %12 : vector<128x9xf32>
    %16 = arith.addf %13, %15 : vector<128x9xf32>
    %c0_12 = arith.constant 0 : index
    %c0_13 = arith.constant 0 : index
    %17 = vector.load %arg6[%c0_12, %c0_13] : memref<128x9xf32, #tpu.memory_space<vmem>>, vector<128x9xf32>
    tpu.vector_store %arg6[%c0_12, %c0_13], %16 {strides = array<i32>} : memref<128x9xf32, #tpu.memory_space<vmem>>, vector<128x9xf32>,
    return
  }
  func.func @transform_0(%arg0: i32) -> (i32, i32) {
    %c0_i32 = arith.constant 0 : i32
    %c0_i32_0 = arith.constant 0 : i32
    %c0_i32_1 = arith.constant 0 : i32
    return %c0_i32, %c0_i32_0 : i32, i32
  }
  func.func @transform_1(%arg0: i32) -> (i32, i32) {
    %c0_i32 = arith.constant 0 : i32
    %c0_i32_0 = arith.constant 0 : i32
    %c0_i32_1 = arith.constant 0 : i32
    return %c0_i32, %c0_i32_0 : i32, i32
  }
  func.func @transform_2(%arg0: i32) -> (i32, i32) {
    %c0_i32 = arith.constant 0 : i32
    %c0_i32_0 = arith.constant 0 : i32
    %c0_i32_1 = arith.constant 0 : i32
    return %c0_i32, %c0_i32_0 : i32, i32
  }
  func.func @transform_3(%arg0: i32) -> (i32, i32) {
    %c0_i32 = arith.constant 0 : i32
    %c0_i32_0 = arith.constant 0 : i32
    %c0_i32_1 = arith.constant 0 : i32
    return %c0_i32, %c0_i32_0 : i32, i32
  }
  func.func @transform_4(%arg0: i32) -> (i32, i32) {
    %c0_i32 = arith.constant 0 : i32
    %c0_i32_0 = arith.constant 0 : i32
    %c0_i32_1 = arith.constant 0 : i32
    return %c0_i32, %c0_i32_0 : i32, i32
  }
  func.func @transform_5(%arg0: i32) -> (i32, i32) {
    %c0_i32 = arith.constant 0 : i32
    %c0_i32_0 = arith.constant 0 : i32
    %c0_i32_1 = arith.constant 0 : i32
    return %c0_i32, %c0_i32_0 : i32, i32
  }
}

</mosaic_0001>

<llo_original>
// kernel: camera_model_forward.3
$region0: #{camera_model_forward.3}
  #allocation0 [shape = 'u32[]', space=smem, size = 0x4, offset = 0x4, fixed_abs, tag = 'smem constant byte address 0x4 - core index']
  #allocation1 [shape = 'u32[144,128]{1,0:T(1,128)}', space=vmem, size = 0x12000, scoped, tag = 'internal scratch']
  %s0 = inlined_call_operand.vmem [shape: s32[8,1], index: 0, kind: input, shape index: {}]
  %s1 = inlined_call_operand.vmem [shape: f32[128,9], index: 1, kind: input, shape index: {}]
  %s2 = inlined_call_operand.hbm [shape: f32[8,9], index: 2, kind: output, shape index: {}]
  %s3 = sld [smem:[#allocation0]]
  $region18: #{camera_model_forward.3} parent=0
    _
  %s5 = ssub.s32 1, %s3
  %s6 = scalar_select 0, %s5, %s3
  $region1: #{camera_model_forward.3} parent=0
    #allocation2 [shape = 'u8[4096]{0}', space=vmem, size = 0x1000, scoped, tag = 'output window, operand 0, single buffered']
    #allocation3 [shape = 's32[1]{0}', space=sflag, size = 0x4, scoped, tag = 'scoped memory for camera_model_forward.3']
    %7 = vsyncpa [#allocation3], 0
    // Predicated region
    $region2: #{camera_model_forward.3} parent=1 // pred_check
      _
    $region3: #{camera_model_forward.3} parent=1 // pred_check_branch
      %9 = sbr.rel (0) target = $region5
    $region4: #{camera_model_forward.3} parent=1 // pred_region
      _
    $region5: #{camera_model_forward.3} parent=1 // pred_fallthru
      _
    // Predicated region
    $region6: #{camera_model_forward.3} parent=1 // pred_check
      _
    $region7: #{camera_model_forward.3} parent=1 // pred_check_branch
      %11 = sbr.rel (0) target = $region9
    $region8: #{camera_model_forward.3} parent=1 // pred_region
      _
    $region9: #{camera_model_forward.3} parent=1 // pred_fallthru
      _
    %v12 = vld [vmem:[%s0] sm:$0xff]
    %v13 = vlaneseq
    %v14 = vand.u32 %v13, 127
    %15 = vset.pattern.permute.xlu0 0
    %16 = vperm.xlu0 %15, %v12
    %v17 = vpop.permute.xlu0 %16
    %vm18 = vcmp.eq.s32.totalorder %v17, %v14
    %v19 = vsel %vm18, 1, 0
    %v20 = vcvt.s32.f32 %v19
    %v21 = vld [vmem:[%s1] sm:$0xff]
    %v22 = vld [vmem:[%s1 + $0x8] sm:$0xff]
    %v23 = vld [vmem:[%s1 + $0x10] sm:$0xff]
    %v24 = vld [vmem:[%s1 + $0x18] sm:$0xff]
    %v25 = vld [vmem:[%s1 + $0x20] sm:$0xff]
    %v26 = vld [vmem:[%s1 + $0x28] sm:$0xff]
    %v27 = vld [vmem:[%s1 + $0x30] sm:$0xff]
    %v28 = vld [vmem:[%s1 + $0x38] sm:$0xff]
    %v29 = vld [vmem:[%s1 + $0x40] sm:$0xff]
    %v30 = vld [vmem:[%s1 + $0x48] sm:$0xff]
    %v31 = vld [vmem:[%s1 + $0x50] sm:$0xff]
    %v32 = vld [vmem:[%s1 + $0x58] sm:$0xff]
    %v33 = vld [vmem:[%s1 + $0x60] sm:$0xff]
    %v34 = vld [vmem:[%s1 + $0x68] sm:$0xff]
    %v35 = vld [vmem:[%s1 + $0x70] sm:$0xff]
    %v36 = vld [vmem:[%s1 + $0x78] sm:$0xff]
    %37 = vmatprep.subr.mxu0 0.0
    %38 = vmatpush1.msra.mxu0 %v21
    %39 = vmatprep.subr.mxu0 0.0
    %40 = vmatpush1.msra.mxu0 %v22
    %41 = vmatprep.subr.mxu0 0.0
    %42 = vmatpush1.msra.mxu0 %v23
    %43 = vmatprep.subr.mxu0 0.0
    %44 = vmatpush1.msra.mxu0 %v24
    %45 = vmatprep.subr.mxu0 0.0
    %46 = vmatpush1.msra.mxu0 %v25
    %47 = vmatprep.subr.mxu0 0.0
    %48 = vmatpush1.msra.mxu0 %v26
    %49 = vmatprep.subr.mxu0 0.0
    %50 = vmatpush1.msra.mxu0 %v27
    %51 = vmatprep.subr.mxu0 0.0
    %52 = vmatpush1.msra.mxu0 %v28
    %53 = vmatprep.subr.mxu0 0.0
    %54 = vmatpush1.msra.mxu0 %v29
    %55 = vmatprep.subr.mxu0 0.0
    %56 = vmatpush1.msra.mxu0 %v30
    %57 = vmatprep.subr.mxu0 0.0
    %58 = vmatpush1.msra.mxu0 %v31
    %59 = vmatprep.subr.mxu0 0.0
    %60 = vmatpush1.msra.mxu0 %v32
    %61 = vmatprep.subr.mxu0 0.0
    %62 = vmatpush1.msra.mxu0 %v33
    %63 = vmatprep.subr.mxu0 0.0
    %64 = vmatpush1.msra.mxu0 %v34
    %65 = vmatprep.subr.mxu0 0.0
    %66 = vmatpush1.msra.mxu0 %v35
    %67 = vmatprep.subr.mxu0 0.0
    %68 = vmatpush1.msra.mxu0 %v36
    %69 = vmatprep.subr.mxu0 0.0
    %70 = vmatpush1.msra.mxu0 0.0
    %71 = vmatprep.subr.mxu0 0.0
    %72 = vmatpush1.msra.mxu0 0.0
    %73 = vmatprep.subr.mxu0 0.0
    %74 = vmatpush1.msra.mxu0 0.0
    %75 = vmatprep.subr.mxu0 0.0
    %76 = vmatpush1.msra.mxu0 0.0
    %77 = vmatprep.subr.mxu0 0.0
    %78 = vmatpush1.msra.mxu0 0.0
    %79 = vmatprep.subr.mxu0 0.0
    %80 = vmatpush1.msra.mxu0 0.0
    %81 = vmatprep.subr.mxu0 0.0
    %82 = vmatpush1.msra.mxu0 0.0
    %83 = vmatprep.subr.mxu0 0.0
    %84 = vmatpush1.msra.mxu0 0.0
    %85 = vmatprep.subr.mxu0 0.0
    %86 = vmatpush1.msra.mxu0 0.0
    %87 = vmatprep.subr.mxu0 0.0
    %88 = vmatpush1.msra.mxu0 0.0
    %89 = vmatprep.subr.mxu0 0.0
    %90 = vmatpush1.msra.mxu0 0.0
    %91 = vmatprep.subr.mxu0 0.0
    %92 = vmatpush1.msra.mxu0 0.0
    %93 = vmatprep.subr.mxu0 0.0
    %94 = vmatpush1.msra.mxu0 0.0
    %95 = vmatprep.subr.mxu0 0.0
    %96 = vmatpush1.msra.mxu0 0.0
    %97 = vmatprep.subr.mxu0 0.0
    %98 = vmatpush1.msra.mxu0 0.0
    %99 = vmatprep.subr.mxu0 0.0
    %100 = vmatpush1.msra.mxu0 0.0
    %101 = vmatprep.mubr.f32.mxu0 0.0
    %102 = vmatmul.mubr.f32.gmra.mrb[0].mxu0 %v20
    %v103 = vpop.f32.mrb[0].mxu0
    %v104 = vadd.f32 0.0, %v103
    %v105 = vpop.f32.mrb[0].mxu0
    %106 = vdwg.mxu0
    %vm107 = vcmask 72704
    %108 = vst.msk [vmem:[#allocation2] sm:$0xff] %vm107, %v104
    // Predicated region
    $region10: #{camera_model_forward.3} parent=1 // pred_check
      _
    $region11: #{camera_model_forward.3} parent=1 // pred_check_branch
      %110 = sbr.rel (0) target = $region13
    $region12: #{camera_model_forward.3} parent=1 // pred_region
      %s112 = ssub.s32 128, 128
      %113 = vsyncadd [#allocation3], %s112
      %s115 = sshll.u32 [#allocation2], 4
      %s116 = int_to_ptr.vmem [resolvable:$true] %s115
      %118 = dma.vmem_to_hbm [thread:$0]  %s116, 128, %s2, [#allocation3]
    $region13: #{camera_model_forward.3} parent=1 // pred_fallthru
      _
    // Predicated region
    $region14: #{camera_model_forward.3} parent=1 // pred_check
      _
    $region15: #{camera_model_forward.3} parent=1 // pred_check_branch
      %120 = sbr.rel (0) target = $region17
    $region16: #{camera_model_forward.3} parent=1 // pred_region
      %121 = dma.done [#allocation3], 128
    $region17: #{camera_model_forward.3} parent=1 // pred_fallthru
      _
    %122 = vsyncpa [#allocation3], 1

// kernel: camera_model_forward.2
$region0: #{camera_model_forward.2}
  #allocation0 [shape = 'u32[]', space=smem, size = 0x4, offset = 0x4, fixed_abs, tag = 'smem constant byte address 0x4 - core index']
  #allocation1 [shape = 'u32[144,128]{1,0:T(1,128)}', space=vmem, size = 0x12000, scoped, tag = 'internal scratch']
  %s0 = inlined_call_operand.vmem [shape: f32[128,10], index: 0, kind: input, shape index: {}]
  %s1 = inlined_call_operand.vmem [shape: f32[10,32], index: 1, kind: input, shape index: {}]
  %s2 = inlined_call_operand.vmem [shape: f32[1,32], index: 2, kind: input, shape index: {}]
  %s3 = inlined_call_operand.vmem [shape: f32[32,9], index: 3, kind: input, shape index: {}]
  %s4 = inlined_call_operand.vmem [shape: f32[1,9], index: 4, kind: input, shape index: {}]
  %s5 = inlined_call_operand.vmem [shape: f32[128,9], index: 5, kind: output, shape index: {}]
  %s6 = sld [smem:[#allocation0]]
  $region30: #{camera_model_forward.2} parent=0
    _
  %s8 = ssub.s32 1, %s6
  %s9 = scalar_select 0, %s8, %s6
  // Predicated region
  $region2: #{camera_model_forward.2} parent=0 // pred_check
    _
  $region3: #{camera_model_forward.2} parent=0 // pred_check_branch
    %11 = sbr.rel (0) target = $region5
  $region4: #{camera_model_forward.2} parent=0 // pred_region
    _
  $region5: #{camera_model_forward.2} parent=0 // pred_fallthru
    _
  // Predicated region
  $region6: #{camera_model_forward.2} parent=0 // pred_check
    _
  $region7: #{camera_model_forward.2} parent=0 // pred_check_branch
    %13 = sbr.rel (0) target = $region9
  $region8: #{camera_model_forward.2} parent=0 // pred_region
    _
  $region9: #{camera_model_forward.2} parent=0 // pred_fallthru
    _
  // Predicated region
  $region10: #{camera_model_forward.2} parent=0 // pred_check
    _
  $region11: #{camera_model_forward.2} parent=0 // pred_check_branch
    %15 = sbr.rel (0) target = $region13
  $region12: #{camera_model_forward.2} parent=0 // pred_region
    _
  $region13: #{camera_model_forward.2} parent=0 // pred_fallthru
    _
  // Predicated region
  $region14: #{camera_model_forward.2} parent=0 // pred_check
    _
  $region15: #{camera_model_forward.2} parent=0 // pred_check_branch
    %17 = sbr.rel (0) target = $region17
  $region16: #{camera_model_forward.2} parent=0 // pred_region
    _
  $region17: #{camera_model_forward.2} parent=0 // pred_fallthru
    _
  // Predicated region
  $region18: #{camera_model_forward.2} parent=0 // pred_check
    _
  $region19: #{camera_model_forward.2} parent=0 // pred_check_branch
    %19 = sbr.rel (0) target = $region21
  $region20: #{camera_model_forward.2} parent=0 // pred_region
    _
  $region21: #{camera_model_forward.2} parent=0 // pred_fallthru
    _
  %v20 = vld [vmem:[%s0] sm:$0xff]
  %v21 = vld [vmem:[%s0 + $0x8] sm:$0xff]
  %v22 = vld [vmem:[%s0 + $0x10] sm:$0xff]
  %v23 = vld [vmem:[%s0 + $0x18] sm:$0xff]
  %v24 = vld [vmem:[%s0 + $0x20] sm:$0xff]
  %v25 = vld [vmem:[%s0 + $0x28] sm:$0xff]
  %v26 = vld [vmem:[%s0 + $0x30] sm:$0xff]
  %v27 = vld [vmem:[%s0 + $0x38] sm:$0xff]
  %v28 = vld [vmem:[%s0 + $0x40] sm:$0xff]
  %v29 = vld [vmem:[%s0 + $0x48] sm:$0xff]
  %v30 = vld [vmem:[%s0 + $0x50] sm:$0xff]
  %v31 = vld [vmem:[%s0 + $0x58] sm:$0xff]
  %v32 = vld [vmem:[%s0 + $0x60] sm:$0xff]
  %v33 = vld [vmem:[%s0 + $0x68] sm:$0xff]
  %v34 = vld [vmem:[%s0 + $0x70] sm:$0xff]
  %v35 = vld [vmem:[%s0 + $0x78] sm:$0xff]
  %v36 = vld [vmem:[%s1] sm:$0xff]
  %v37 = vld [vmem:[%s1 + $0x8] sm:$0x3]
  %v38 = vld [vmem:[%s2] sm:$0x1]
  %v40 = vlaneseq
  %v41 = vshrl.u32 %v40, 7
  %v42 = vsub.s32 0, %v41
  %v43 = vrot.slane %v38, %v42
  %vm45 = vcmask 80896
  %v47 = vsel %vm45, %v20, 0
  %v50 = vsel %vm45, %v21, 0
  %v53 = vsel %vm45, %v22, 0
  %v56 = vsel %vm45, %v23, 0
  %v59 = vsel %vm45, %v24, 0
  %v62 = vsel %vm45, %v25, 0
  %v65 = vsel %vm45, %v26, 0
  %v68 = vsel %vm45, %v27, 0
  %v71 = vsel %vm45, %v28, 0
  %v74 = vsel %vm45, %v29, 0
  %v77 = vsel %vm45, %v30, 0
  %v80 = vsel %vm45, %v31, 0
  %v83 = vsel %vm45, %v32, 0
  %v86 = vsel %vm45, %v33, 0
  %v89 = vsel %vm45, %v34, 0
  %v92 = vsel %vm45, %v35, 0
  %vm94 = vcmask 1041408
  %v96 = vsel %vm94, %v37, 0
  %98 = vmatprep.subr.mxu0 0.0
  %99 = vmatpush1.msra.mxu0 %v36
  %100 = vmatprep.subr.mxu0 0.0
  %101 = vmatpush1.msra.mxu0 %v96
  %102 = vmatprep.subr.mxu0 0.0
  %103 = vmatpush1.msra.mxu0 0.0
  %104 = vmatprep.subr.mxu0 0.0
  %105 = vmatpush1.msra.mxu0 0.0
  %106 = vmatprep.subr.mxu0 0.0
  %107 = vmatpush1.msra.mxu0 0.0
  %108 = vmatprep.subr.mxu0 0.0
  %109 = vmatpush1.msra.mxu0 0.0
  %110 = vmatprep.subr.mxu0 0.0
  %111 = vmatpush1.msra.mxu0 0.0
  %112 = vmatprep.subr.mxu0 0.0
  %113 = vmatpush1.msra.mxu0 0.0
  %114 = vmatprep.subr.mxu0 0.0
  %115 = vmatpush1.msra.mxu0 0.0
  %116 = vmatprep.subr.mxu0 0.0
  %117 = vmatpush1.msra.mxu0 0.0
  %118 = vmatprep.subr.mxu0 0.0
  %119 = vmatpush1.msra.mxu0 0.0
  %120 = vmatprep.subr.mxu0 0.0
  %121 = vmatpush1.msra.mxu0 0.0
  %122 = vmatprep.subr.mxu0 0.0
  %123 = vmatpush1.msra.mxu0 0.0
  %124 = vmatprep.subr.mxu0 0.0
  %125 = vmatpush1.msra.mxu0 0.0
  %126 = vmatprep.subr.mxu0 0.0
  %127 = vmatpush1.msra.mxu0 0.0
  %128 = vmatprep.subr.mxu0 0.0
  %129 = vmatpush1.msra.mxu0 0.0
  %130 = vmatprep.subr.mxu0 0.0
  %131 = vmatpush1.msra.mxu0 0.0
  %132 = vmatprep.subr.mxu0 0.0
  %133 = vmatpush1.msra.mxu0 0.0
  %134 = vmatprep.subr.mxu0 0.0
  %135 = vmatpush1.msra.mxu0 0.0
  %136 = vmatprep.subr.mxu0 0.0
  %137 = vmatpush1.msra.mxu0 0.0
  %138 = vmatprep.subr.mxu0 0.0
  %139 = vmatpush1.msra.mxu0 0.0
  %140 = vmatprep.subr.mxu0 0.0
  %141 = vmatpush1.msra.mxu0 0.0
  %142 = vmatprep.subr.mxu0 0.0
  %143 = vmatpush1.msra.mxu0 0.0
  %144 = vmatprep.subr.mxu0 0.0
  %145 = vmatpush1.msra.mxu0 0.0
  %146 = vmatprep.subr.mxu0 0.0
  %147 = vmatpush1.msra.mxu0 0.0
  %148 = vmatprep.subr.mxu0 0.0
  %149 = vmatpush1.msra.mxu0 0.0
  %150 = vmatprep.subr.mxu0 0.0
  %151 = vmatpush1.msra.mxu0 0.0
  %152 = vmatprep.subr.mxu0 0.0
  %153 = vmatpush1.msra.mxu0 0.0
  %154 = vmatprep.subr.mxu0 0.0
  %155 = vmatpush1.msra.mxu0 0.0
  %156 = vmatprep.subr.mxu0 0.0
  %157 = vmatpush1.msra.mxu0 0.0
  %158 = vmatprep.subr.mxu0 0.0
  %159 = vmatpush1.msra.mxu0 0.0
  %160 = vmatprep.subr.mxu0 0.0
  %161 = vmatpush1.msra.mxu0 0.0
  %162 = vmatprep.mubr.f32.mxu0 0.0
  %163 = vmatmul.mubr.f32.gmra.mrb[0].mxu0 %v47
  %v164 = vpop.f32.mrb[0].mxu0
  %v165 = vadd.f32 %v43, %v164
  %v166 = vpop.f32.mrb[0].mxu0
  %167 = vmatprep.mubr.f32.mxu0 0.0
  %168 = vmatmul.mubr.f32.gmra.mrb[0].mxu0 %v50
  %v169 = vpop.f32.mrb[0].mxu0
  %v170 = vadd.f32 %v43, %v169
  %v171 = vpop.f32.mrb[0].mxu0
  %172 = vmatprep.mubr.f32.mxu0 0.0
  %173 = vmatmul.mubr.f32.gmra.mrb[0].mxu0 %v53
  %v174 = vpop.f32.mrb[0].mxu0
  %v175 = vadd.f32 %v43, %v174
  %v176 = vpop.f32.mrb[0].mxu0
  %177 = vmatprep.mubr.f32.mxu0 0.0
  %178 = vmatmul.mubr.f32.gmra.mrb[0].mxu0 %v56
  %v179 = vpop.f32.mrb[0].mxu0
  %v180 = vadd.f32 %v43, %v179
  %v181 = vpop.f32.mrb[0].mxu0
  %182 = vmatprep.mubr.f32.mxu0 0.0
  %183 = vmatmul.mubr.f32.gmra.mrb[0].mxu0 %v59
  %v184 = vpop.f32.mrb[0].mxu0
  %v185 = vadd.f32 %v43, %v184
  %v186 = vpop.f32.mrb[0].mxu0
  %187 = vmatprep.mubr.f32.mxu0 0.0
  %188 = vmatmul.mubr.f32.gmra.mrb[0].mxu0 %v62
  %v189 = vpop.f32.mrb[0].mxu0
  %v190 = vadd.f32 %v43, %v189
  %v191 = vpop.f32.mrb[0].mxu0
  %192 = vmatprep.mubr.f32.mxu0 0.0
  %193 = vmatmul.mubr.f32.gmra.mrb[0].mxu0 %v65
  %v194 = vpop.f32.mrb[0].mxu0
  %v195 = vadd.f32 %v43, %v194
  %v196 = vpop.f32.mrb[0].mxu0
  %197 = vmatprep.mubr.f32.mxu0 0.0
  %198 = vmatmul.mubr.f32.gmra.mrb[0].mxu0 %v68
  %v199 = vpop.f32.mrb[0].mxu0
  %v200 = vadd.f32 %v43, %v199
  %v201 = vpop.f32.mrb[0].mxu0
  %202 = vmatprep.mubr.f32.mxu0 0.0
  %203 = vmatmul.mubr.f32.gmra.mrb[0].mxu0 %v71
  %v204 = vpop.f32.mrb[0].mxu0
  %v205 = vadd.f32 %v43, %v204
  %v206 = vpop.f32.mrb[0].mxu0
  %207 = vmatprep.mubr.f32.mxu0 0.0
  %208 = vmatmul.mubr.f32.gmra.mrb[0].mxu0 %v74
  %v209 = vpop.f32.mrb[0].mxu0
  %v210 = vadd.f32 %v43, %v209
  %v211 = vpop.f32.mrb[0].mxu0
  %212 = vmatprep.mubr.f32.mxu0 0.0
  %213 = vmatmul.mubr.f32.gmra.mrb[0].mxu0 %v77
  %v214 = vpop.f32.mrb[0].mxu0
  %v215 = vadd.f32 %v43, %v214
  %v216 = vpop.f32.mrb[0].mxu0
  %217 = vmatprep.mubr.f32.mxu0 0.0
  %218 = vmatmul.mubr.f32.gmra.mrb[0].mxu0 %v80
  %v219 = vpop.f32.mrb[0].mxu0
  %v220 = vadd.f32 %v43, %v219
  %v221 = vpop.f32.mrb[0].mxu0
  %222 = vmatprep.mubr.f32.mxu0 0.0
  %223 = vmatmul.mubr.f32.gmra.mrb[0].mxu0 %v83
  %v224 = vpop.f32.mrb[0].mxu0
  %v225 = vadd.f32 %v43, %v224
  %v226 = vpop.f32.mrb[0].mxu0
  %227 = vmatprep.mubr.f32.mxu0 0.0
  %228 = vmatmul.mubr.f32.gmra.mrb[0].mxu0 %v86
  %v229 = vpop.f32.mrb[0].mxu0
  %v230 = vadd.f32 %v43, %v229
  %v231 = vpop.f32.mrb[0].mxu0
  %232 = vmatprep.mubr.f32.mxu0 0.0
  %233 = vmatmul.mubr.f32.gmra.mrb[0].mxu0 %v89
  %v234 = vpop.f32.mrb[0].mxu0
  %v235 = vadd.f32 %v43, %v234
  %v236 = vpop.f32.mrb[0].mxu0
  %237 = vmatprep.mubr.f32.mxu0 0.0
  %238 = vmatmul.mubr.f32.gmra.mrb[0].mxu0 %v92
  %v239 = vpop.f32.mrb[0].mxu0
  %v240 = vadd.f32 %v43, %v239
  %v241 = vpop.f32.mrb[0].mxu0
  %242 = vdwg.mxu0
  %v243 = vmax.f32 %v165, 0.0
  %v244 = vmax.f32 %v170, 0.0
  %v245 = vmax.f32 %v175, 0.0
  %v246 = vmax.f32 %v180, 0.0
  %v247 = vmax.f32 %v185, 0.0
  %v248 = vmax.f32 %v190, 0.0
  %v249 = vmax.f32 %v195, 0.0
  %v250 = vmax.f32 %v200, 0.0
  %v251 = vmax.f32 %v205, 0.0
  %v252 = vmax.f32 %v210, 0.0
  %v253 = vmax.f32 %v215, 0.0
  %v254 = vmax.f32 %v220, 0.0
  %v255 = vmax.f32 %v225, 0.0
  %v256 = vmax.f32 %v230, 0.0
  %v257 = vmax.f32 %v235, 0.0
  %v258 = vmax.f32 %v240, 0.0
  %v259 = vld [vmem:[%s3] sm:$0xff]
  %v260 = vld [vmem:[%s3 + $0x8] sm:$0xff]
  %v261 = vld [vmem:[%s3 + $0x10] sm:$0xff]
  %v262 = vld [vmem:[%s3 + $0x18] sm:$0xff]
  %v263 = vld [vmem:[%s4] sm:$0x1]
  %v265 = vlaneseq
  %v266 = vshrl.u32 %v265, 7
  %v267 = vsub.s32 0, %v266
  %v268 = vrot.slane %v263, %v267
  %vm270 = vcmask 261120
  %v272 = vsel %vm270, %v243, 0
  %v275 = vsel %vm270, %v244, 0
  %v278 = vsel %vm270, %v245, 0
  %v281 = vsel %vm270, %v246, 0
  %v284 = vsel %vm270, %v247, 0
  %v287 = vsel %vm270, %v248, 0
  %v290 = vsel %vm270, %v249, 0
  %v293 = vsel %vm270, %v250, 0
  %v296 = vsel %vm270, %v251, 0
  %v299 = vsel %vm270, %v252, 0
  %v302 = vsel %vm270, %v253, 0
  %v305 = vsel %vm270, %v254, 0
  %v308 = vsel %vm270, %v255, 0
  %v311 = vsel %vm270, %v256, 0
  %v314 = vsel %vm270, %v257, 0
  %v317 = vsel %vm270, %v258, 0
  %319 = vmatprep.subr.mxu0 0.0
  %320 = vmatpush1.msra.mxu0 %v259
  %321 = vmatprep.subr.mxu0 0.0
  %322 = vmatpush1.msra.mxu0 %v260
  %323 = vmatprep.subr.mxu0 0.0
  %324 = vmatpush1.msra.mxu0 %v261
  %325 = vmatprep.subr.mxu0 0.0
  %326 = vmatpush1.msra.mxu0 %v262
  %327 = vmatprep.subr.mxu0 0.0
  %328 = vmatpush1.msra.mxu0 0.0
  %329 = vmatprep.subr.mxu0 0.0
  %330 = vmatpush1.msra.mxu0 0.0
  %331 = vmatprep.subr.mxu0 0.0
  %332 = vmatpush1.msra.mxu0 0.0
  %333 = vmatprep.subr.mxu0 0.0
  %334 = vmatpush1.msra.mxu0 0.0
  %335 = vmatprep.subr.mxu0 0.0
  %336 = vmatpush1.msra.mxu0 0.0
  %337 = vmatprep.subr.mxu0 0.0
  %338 = vmatpush1.msra.mxu0 0.0
  %339 = vmatprep.subr.mxu0 0.0
  %340 = vmatpush1.msra.mxu0 0.0
  %341 = vmatprep.subr.mxu0 0.0
  %342 = vmatpush1.msra.mxu0 0.0
  %343 = vmatprep.subr.mxu0 0.0
  %344 = vmatpush1.msra.mxu0 0.0
  %345 = vmatprep.subr.mxu0 0.0
  %346 = vmatpush1.msra.mxu0 0.0
  %347 = vmatprep.subr.mxu0 0.0
  %348 = vmatpush1.msra.mxu0 0.0
  %349 = vmatprep.subr.mxu0 0.0
  %350 = vmatpush1.msra.mxu0 0.0
  %351 = vmatprep.subr.mxu0 0.0
  %352 = vmatpush1.msra.mxu0 0.0
  %353 = vmatprep.subr.mxu0 0.0
  %354 = vmatpush1.msra.mxu0 0.0
  %355 = vmatprep.subr.mxu0 0.0
  %356 = vmatpush1.msra.mxu0 0.0
  %357 = vmatprep.subr.mxu0 0.0
  %358 = vmatpush1.msra.mxu0 0.0
  %359 = vmatprep.subr.mxu0 0.0
  %360 = vmatpush1.msra.mxu0 0.0
  %361 = vmatprep.subr.mxu0 0.0
  %362 = vmatpush1.msra.mxu0 0.0
  %363 = vmatprep.subr.mxu0 0.0
  %364 = vmatpush1.msra.mxu0 0.0
  %365 = vmatprep.subr.mxu0 0.0
  %366 = vmatpush1.msra.mxu0 0.0
  %367 = vmatprep.subr.mxu0 0.0
  %368 = vmatpush1.msra.mxu0 0.0
  %369 = vmatprep.subr.mxu0 0.0
  %370 = vmatpush1.msra.mxu0 0.0
  %371 = vmatprep.subr.mxu0 0.0
  %372 = vmatpush1.msra.mxu0 0.0
  %373 = vmatprep.subr.mxu0 0.0
  %374 = vmatpush1.msra.mxu0 0.0
  %375 = vmatprep.subr.mxu0 0.0
  %376 = vmatpush1.msra.mxu0 0.0
  %377 = vmatprep.subr.mxu0 0.0
  %378 = vmatpush1.msra.mxu0 0.0
  %379 = vmatprep.subr.mxu0 0.0
  %380 = vmatpush1.msra.mxu0 0.0
  %381 = vmatprep.subr.mxu0 0.0
  %382 = vmatpush1.msra.mxu0 0.0
  %383 = vmatprep.mubr.f32.mxu0 0.0
  %384 = vmatmul.mubr.f32.gmra.mrb[0].mxu0 %v272
  %v385 = vpop.f32.mrb[0].mxu0
  %v386 = vadd.f32 %v268, %v385
  %v387 = vpop.f32.mrb[0].mxu0
  %388 = vmatprep.mubr.f32.mxu0 0.0
  %389 = vmatmul.mubr.f32.gmra.mrb[0].mxu0 %v275
  %v390 = vpop.f32.mrb[0].mxu0
  %v391 = vadd.f32 %v268, %v390
  %v392 = vpop.f32.mrb[0].mxu0
  %393 = vmatprep.mubr.f32.mxu0 0.0
  %394 = vmatmul.mubr.f32.gmra.mrb[0].mxu0 %v278
  %v395 = vpop.f32.mrb[0].mxu0
  %v396 = vadd.f32 %v268, %v395
  %v397 = vpop.f32.mrb[0].mxu0
  %398 = vmatprep.mubr.f32.mxu0 0.0
  %399 = vmatmul.mubr.f32.gmra.mrb[0].mxu0 %v281
  %v400 = vpop.f32.mrb[0].mxu0
  %v401 = vadd.f32 %v268, %v400
  %v402 = vpop.f32.mrb[0].mxu0
  %403 = vmatprep.mubr.f32.mxu0 0.0
  %404 = vmatmul.mubr.f32.gmra.mrb[0].mxu0 %v284
  %v405 = vpop.f32.mrb[0].mxu0
  %v406 = vadd.f32 %v268, %v405
  %v407 = vpop.f32.mrb[0].mxu0
  %408 = vmatprep.mubr.f32.mxu0 0.0
  %409 = vmatmul.mubr.f32.gmra.mrb[0].mxu0 %v287
  %v410 = vpop.f32.mrb[0].mxu0
  %v411 = vadd.f32 %v268, %v410
  %v412 = vpop.f32.mrb[0].mxu0
  %413 = vmatprep.mubr.f32.mxu0 0.0
  %414 = vmatmul.mubr.f32.gmra.mrb[0].mxu0 %v290
  %v415 = vpop.f32.mrb[0].mxu0
  %v416 = vadd.f32 %v268, %v415
  %v417 = vpop.f32.mrb[0].mxu0
  %418 = vmatprep.mubr.f32.mxu0 0.0
  %419 = vmatmul.mubr.f32.gmra.mrb[0].mxu0 %v293
  %v420 = vpop.f32.mrb[0].mxu0
  %v421 = vadd.f32 %v268, %v420
  %v422 = vpop.f32.mrb[0].mxu0
  %423 = vmatprep.mubr.f32.mxu0 0.0
  %424 = vmatmul.mubr.f32.gmra.mrb[0].mxu0 %v296
  %v425 = vpop.f32.mrb[0].mxu0
  %v426 = vadd.f32 %v268, %v425
  %v427 = vpop.f32.mrb[0].mxu0
  %428 = vmatprep.mubr.f32.mxu0 0.0
  %429 = vmatmul.mubr.f32.gmra.mrb[0].mxu0 %v299
  %v430 = vpop.f32.mrb[0].mxu0
  %v431 = vadd.f32 %v268, %v430
  %v432 = vpop.f32.mrb[0].mxu0
  %433 = vmatprep.mubr.f32.mxu0 0.0
  %434 = vmatmul.mubr.f32.gmra.mrb[0].mxu0 %v302
  %v435 = vpop.f32.mrb[0].mxu0
  %v436 = vadd.f32 %v268, %v435
  %v437 = vpop.f32.mrb[0].mxu0
  %438 = vmatprep.mubr.f32.mxu0 0.0
  %439 = vmatmul.mubr.f32.gmra.mrb[0].mxu0 %v305
  %v440 = vpop.f32.mrb[0].mxu0
  %v441 = vadd.f32 %v268, %v440
  %v442 = vpop.f32.mrb[0].mxu0
  %443 = vmatprep.mubr.f32.mxu0 0.0
  %444 = vmatmul.mubr.f32.gmra.mrb[0].mxu0 %v308
  %v445 = vpop.f32.mrb[0].mxu0
  %v446 = vadd.f32 %v268, %v445
  %v447 = vpop.f32.mrb[0].mxu0
  %448 = vmatprep.mubr.f32.mxu0 0.0
  %449 = vmatmul.mubr.f32.gmra.mrb[0].mxu0 %v311
  %v450 = vpop.f32.mrb[0].mxu0
  %v451 = vadd.f32 %v268, %v450
  %v452 = vpop.f32.mrb[0].mxu0
  %453 = vmatprep.mubr.f32.mxu0 0.0
  %454 = vmatmul.mubr.f32.gmra.mrb[0].mxu0 %v314
  %v455 = vpop.f32.mrb[0].mxu0
  %v456 = vadd.f32 %v268, %v455
  %v457 = vpop.f32.mrb[0].mxu0
  %458 = vmatprep.mubr.f32.mxu0 0.0
  %459 = vmatmul.mubr.f32.gmra.mrb[0].mxu0 %v317
  %v460 = vpop.f32.mrb[0].mxu0
  %v461 = vadd.f32 %v268, %v460
  %v462 = vpop.f32.mrb[0].mxu0
  %463 = vdwg.mxu0
  %v464 = vmul.f32 %v386, 0.01
  %v465 = vmul.f32 %v391, 0.01
  %v466 = vmul.f32 %v396, 0.01
  %v467 = vmul.f32 %v401, 0.01
  %v468 = vmul.f32 %v406, 0.01
  %v469 = vmul.f32 %v411, 0.01
  %v470 = vmul.f32 %v416, 0.01
  %v471 = vmul.f32 %v421, 0.01
  %v472 = vmul.f32 %v426, 0.01
  %v473 = vmul.f32 %v431, 0.01
  %v474 = vmul.f32 %v436, 0.01
  %v475 = vmul.f32 %v441, 0.01
  %v476 = vmul.f32 %v446, 0.01
  %v477 = vmul.f32 %v451, 0.01
  %v478 = vmul.f32 %v456, 0.01
  %v479 = vmul.f32 %v461, 0.01
  %v480 = vadd.f32 %v20, %v464
  %v481 = vadd.f32 %v21, %v465
  %v482 = vadd.f32 %v22, %v466
  %v483 = vadd.f32 %v23, %v467
  %v484 = vadd.f32 %v24, %v468
  %v485 = vadd.f32 %v25, %v469
  %v486 = vadd.f32 %v26, %v470
  %v487 = vadd.f32 %v27, %v471
  %v488 = vadd.f32 %v28, %v472
  %v489 = vadd.f32 %v29, %v473
  %v490 = vadd.f32 %v30, %v474
  %v491 = vadd.f32 %v31, %v475
  %v492 = vadd.f32 %v32, %v476
  %v493 = vadd.f32 %v33, %v477
  %v494 = vadd.f32 %v34, %v478
  %v495 = vadd.f32 %v35, %v479
  %vm496 = vcmask 72704
  %497 = vst.msk [vmem:[%s5] sm:$0xff] %vm496, %v480
  %498 = vst.msk [vmem:[%s5 + $0x8] sm:$0xff] %vm496, %v481
  %499 = vst.msk [vmem:[%s5 + $0x10] sm:$0xff] %vm496, %v482
  %500 = vst.msk [vmem:[%s5 + $0x18] sm:$0xff] %vm496, %v483
  %501 = vst.msk [vmem:[%s5 + $0x20] sm:$0xff] %vm496, %v484
  %502 = vst.msk [vmem:[%s5 + $0x28] sm:$0xff] %vm496, %v485
  %503 = vst.msk [vmem:[%s5 + $0x30] sm:$0xff] %vm496, %v486
  %504 = vst.msk [vmem:[%s5 + $0x38] sm:$0xff] %vm496, %v487
  %505 = vst.msk [vmem:[%s5 + $0x40] sm:$0xff] %vm496, %v488
  %506 = vst.msk [vmem:[%s5 + $0x48] sm:$0xff] %vm496, %v489
  %507 = vst.msk [vmem:[%s5 + $0x50] sm:$0xff] %vm496, %v490
  %508 = vst.msk [vmem:[%s5 + $0x58] sm:$0xff] %vm496, %v491
  %509 = vst.msk [vmem:[%s5 + $0x60] sm:$0xff] %vm496, %v492
  %510 = vst.msk [vmem:[%s5 + $0x68] sm:$0xff] %vm496, %v493
  %511 = vst.msk [vmem:[%s5 + $0x70] sm:$0xff] %vm496, %v494
  %512 = vst.msk [vmem:[%s5 + $0x78] sm:$0xff] %vm496, %v495
  // Predicated region
  $region22: #{camera_model_forward.2} parent=0 // pred_check
    _
  $region23: #{camera_model_forward.2} parent=0 // pred_check_branch
    %514 = sbr.rel (0) target = $region25
  $region24: #{camera_model_forward.2} parent=0 // pred_region
    _
  $region25: #{camera_model_forward.2} parent=0 // pred_fallthru
    _
  // Predicated region
  $region26: #{camera_model_forward.2} parent=0 // pred_check
    _
  $region27: #{camera_model_forward.2} parent=0 // pred_check_branch
    %516 = sbr.rel (0) target = $region29
  $region28: #{camera_model_forward.2} parent=0 // pred_region
    _
  $region29: #{camera_model_forward.2} parent=0 // pred_fallthru
    _

</llo_original>
